<compile_context>
chip_gen: v6e
topology: v6e:2x2x1
jax: 0.10.0
libtpu: 0.0.40
codegen_flags: <defaults>
</compile_context>

<pallas_src>
import functools

import jax
import jax.numpy as jnp
from jax import lax
from jax.experimental import pallas as pl
from jax.experimental.pallas import tpu as pltpu


LANE_CHUNK = 512  # lanes reduced per inner-loop step (bounds the f32 temp)


def channel_attention_kernel(x_ref, w1_ref, w2_ref, o_ref, sum_sc, max_sc, *,
                             hw, thw, chunk, need_mask):
    # x_ref: (TB, C, THW)   w1_ref: (C, hidden)   w2_ref: (hidden, C)
    # o_ref: (TB, 1, C)     sum_sc/max_sc: (TB, C) f32 scratch
    k = pl.program_id(1)

    @pl.when(k == 0)
    def _():
        sum_sc[...] = jnp.zeros_like(sum_sc)
        max_sc[...] = jnp.full_like(max_sc, -jnp.inf)

    def reduce_chunk(start):
        xs = x_ref[:, :, pl.ds(start, chunk)].astype(jnp.float32)
        if need_mask:
            # Global lane position of each element in this chunk; positions at
            # or beyond HW (grid/tile padding) contribute 0 to the sum and
            # -inf to the max.  Two cheap VPU selects per chunk.
            pos = (k * thw + start
                   + lax.broadcasted_iota(jnp.int32, xs.shape, 2))
            valid = pos < hw
            s = jnp.sum(jnp.where(valid, xs, 0.0), axis=-1)
            m = jnp.max(jnp.where(valid, xs, -jnp.inf), axis=-1)
        else:
            s = jnp.sum(xs, axis=-1)
            m = jnp.max(xs, axis=-1)
        sum_sc[...] = sum_sc[...] + s
        max_sc[...] = jnp.maximum(max_sc[...], m)

    num_chunks = thw // chunk
    if num_chunks <= 1:
        reduce_chunk(0)
    else:
        @pl.loop(0, num_chunks)
        def _(c):
            reduce_chunk(pl.multiple_of(c * chunk, chunk))

    @pl.when(k == pl.num_programs(1) - 1)
    def _():
        x_avg = sum_sc[...] * (1.0 / hw)                   # (TB, C)
        x_max = max_sc[...]                                # (TB, C)
        tb = x_avg.shape[0]
        # Fused MLP (both 1x1 convs are bias=False in the source module):
        #   mlp(avg) + mlp(max) == (relu(avg@W1) + relu(max@W1)) @ W2
        stacked = jnp.concatenate([x_avg, x_max], axis=0)            # (2TB, C)
        h = jnp.dot(stacked, w1_ref[...],
                    preferred_element_type=jnp.float32)              # (2TB, h)
        h = jnp.maximum(h, 0.0)                                      # ReLU
        h_sum = h[:tb] + h[tb:]                                      # (TB, h)
        y = jnp.dot(h_sum, w2_ref[...],
                    preferred_element_type=jnp.float32)              # (TB, C)
        o_ref[...] = jax.nn.sigmoid(y)[:, None, :]


def _largest_divisor_leq(n, cap):
    for d in range(min(n, cap), 0, -1):
        if n % d == 0:
            return d
    return 1


def _vmem_plan():
    """Generation-aware (vmem_limit_bytes, per-x-tile byte budget)."""
    cap = None
    try:
        cap = getattr(pltpu.get_tpu_info(), "vmem_capacity_bytes", None)
    except Exception:
        cap = None
    if cap is None:
        cap = 64 * 1024 * 1024              # conservative (v7x-sized) fallback
    if cap <= 64 * 1024 * 1024:
        # v7x: 64 MiB physical per TC -> explicit budget with compiler headroom.
        return 44 * 1024 * 1024, 8 * 1024 * 1024
    # v5e / v6e: 128 MiB physical; raise the scoped limit and use fat tiles.
    return 64 * 1024 * 1024, 8 * 1024 * 1024


def _pick_hw_tile(hw, tb, c, itemsize, tile_budget_bytes):
    """THW: full extent if it fits the budget, else the largest lane-aligned
    multiple of LANE_CHUNK that does; ragged remainders are masked in-kernel."""
    budget_elems = tile_budget_bytes // max(1, tb * c * itemsize)
    if hw <= max(budget_elems, LANE_CHUNK):
        return hw
    return max(LANE_CHUNK, (budget_elems // LANE_CHUNK) * LANE_CHUNK)


def channel_attention(x, w1, w2, *, tile_budget_bytes=None, max_batch_tile=8):
    """x: (B, C, H, W) NCHW.  w1: (hidden, C, 1, 1).  w2: (C, hidden, 1, 1)."""
    B, C, H, W = x.shape
    hidden = w1.shape[0]
    HW = H * W

    vmem_limit, default_tile_budget = _vmem_plan()
    if tile_budget_bytes is None:
        tile_budget_bytes = default_tile_budget

    # No dtype cast on x: stream it in its native dtype (bf16 stays bf16).
    x_flat = x.reshape(B, C, HW)
    # Conv2d(in, out, 1) with weight (out, in, 1, 1)  ==  y = p @ W.T
    w1_mat = w1.reshape(hidden, C).T.astype(jnp.float32)   # (C, hidden)
    w2_mat = w2.reshape(C, hidden).T.astype(jnp.float32)   # (hidden, C)

    # Batch tile: largest divisor of B (<= max_batch_tile).  Do NOT force >=2
    # batch grid steps -- fewer, fatter tiles beat manufactured parallelism.
    tb = _largest_divisor_leq(B, max_batch_tile)
    thw = _pick_hw_tile(HW, tb, C, x_flat.dtype.itemsize, tile_budget_bytes)
    num_b = B // tb
    num_k = -(-HW // thw)
    chunk = LANE_CHUNK if thw % LANE_CHUNK == 0 else thw
    need_mask = (HW % thw) != 0

    kernel = functools.partial(channel_attention_kernel, hw=HW, thw=thw,
                               chunk=chunk, need_mask=need_mask)

    out = pl.pallas_call(
        kernel,
        out_shape=jax.ShapeDtypeStruct((B, 1, C), jnp.float32),
        grid_spec=pltpu.PrefetchScalarGridSpec(
            num_scalar_prefetch=0,
            grid=(num_b, num_k),
            in_specs=[
                # Default double-buffering: spend VMEM on tile size rather
                # than extra buffer depth (compute per tile is negligible).
                pl.BlockSpec((tb, C, thw), lambda b, k: (b, 0, k)),
                pl.BlockSpec((C, hidden), lambda b, k: (0, 0)),
                pl.BlockSpec((hidden, C), lambda b, k: (0, 0)),
            ],
            out_specs=pl.BlockSpec((tb, 1, C), lambda b, k: (b, 0, 0)),
            scratch_shapes=[
                pltpu.VMEM((tb, C), jnp.float32),   # running sum (avg pool)
                pltpu.VMEM((tb, C), jnp.float32),   # running max (max pool)
            ],
        ),
        compiler_params=pltpu.CompilerParams(
            dimension_semantics=("parallel", "arbitrary"),
            vmem_limit_bytes=vmem_limit,
        ),
    )(x_flat, w1_mat, w2_mat)

    return out.reshape(B, C, 1, 1).astype(x.dtype)


def channel_attention_ref(x, w1, w2):
    """Pure-JAX reference matching the PyTorch forward."""
    B, C, H, W = x.shape
    hidden = w1.shape[0]
    xf = x.reshape(B, C, H * W).astype(jnp.float32)
    x_avg = jnp.mean(xf, axis=-1)          # (B, C)
    x_max = jnp.max(xf, axis=-1)           # (B, C)
    w1m = w1.reshape(hidden, C).astype(jnp.float32)
    w2m = w2.reshape(C, hidden).astype(jnp.float32)

    def mlp(p):
        h = jnp.maximum(p @ w1m.T, 0.0)
        return h @ w2m.T

    y = jax.nn.sigmoid(mlp(x_avg) + mlp(x_max))
    return y.reshape(B, C, 1, 1)


if __name__ == "__main__":
    # channels=64, ratio=16 -> hidden=4
    C, ratio = 64, 16
    hidden = C // ratio

    key = jax.random.PRNGKey(0)
    kx, k1, k2, kx2 = jax.random.split(key, 4)
    w1 = jax.random.normal(k1, (hidden, C, 1, 1), dtype=jnp.float32) * 0.1
    w2 = jax.random.normal(k2, (C, hidden, 1, 1), dtype=jnp.float32) * 0.1

    # Test 1: default plan -> single fat tile per batch block (1 grid step).
    B, H, W = 4, 16, 16
    x = jax.random.normal(kx, (B, C, H, W), dtype=jnp.float32)
    out = jax.block_until_ready(channel_attention(x, w1, w2))
    ref = channel_attention_ref(x, w1, w2)
    assert out.shape == (B, C, 1, 1)
    assert jnp.allclose(out, ref, atol=1e-5, rtol=1e-5)

    # Test 2: ragged HW (36*36 = 1296, not a multiple of the 1024-lane tile)
    # with the tile budget forced small -> exercises the multi-step
    # reduction accumulator, the chunked pl.loop path, and OOB lane masking.
    B2, H2, W2 = 2, 36, 36
    x2 = jax.random.normal(kx2, (B2, C, H2, W2), dtype=jnp.float32)
    out2 = jax.block_until_ready(
        channel_attention(x2, w1, w2, tile_budget_bytes=512 * 1024))
    ref2 = channel_attention_ref(x2, w1, w2)
    assert out2.shape == (B2, C, 1, 1)
    assert jnp.allclose(out2, ref2, atol=1e-5, rtol=1e-5)

    print("KERNEL_OK")
</pallas_src>

<mosaic_0001>
module attributes {stable_mosaic.version = 11 : i64} {
  func.func @channel_attention_kernel(%arg0: i32, %arg1: i32, %arg2: memref<4x64x256xf32, #tpu.memory_space<vmem>>, %arg3: memref<64x4xf32, #tpu.memory_space<vmem>>, %arg4: memref<4x64xf32, #tpu.memory_space<vmem>>, %arg5: memref<4x1x64xf32, #tpu.memory_space<vmem>>, %arg6: memref<4x64xf32, #tpu.memory_space<vmem>>, %arg7: memref<4x64xf32, #tpu.memory_space<vmem>>) attributes {dimension_semantics = [#tpu.dimension_semantics<parallel>, #tpu.dimension_semantics<arbitrary>], iteration_bounds = array<i64: 1, 1>, scalar_prefetch = 0 : i64, scratch_operands = 2 : i64, tpu.core_type = #tpu.core_type<tc>, window_params = [{transform_indices = @transform_0, window_bounds = array<i64: 4, 64, 256>}, {pipeline_mode = #tpu.pipeline_mode<synchronous>, transform_indices = @transform_1, window_bounds = array<i64: 64, 4>}, {pipeline_mode = #tpu.pipeline_mode<synchronous>, transform_indices = @transform_2, window_bounds = array<i64: 4, 64>}, {transform_indices = @transform_3, window_bounds = array<i64: 4, 1, 64>}]} {
    %c0_i32 = arith.constant 0 : i32
    %0 = arith.cmpi eq, %arg1, %c0_i32 : i32
    %1 = arith.extui %0 : i1 to i32
    %c0_i32_0 = arith.constant 0 : i32
    %2 = arith.cmpi ne, %1, %c0_i32_0 : i32
    scf.if %2 {
      %cst_14 = arith.constant 0.000000e+00 : f32
      %15 = vector.broadcast %cst_14 : f32 to vector<4x64xf32>
      %c0_15 = arith.constant 0 : index
      %c0_16 = arith.constant 0 : index
      %16 = vector.load %arg6[%c0_15, %c0_16] : memref<4x64xf32, #tpu.memory_space<vmem>>, vector<4x64xf32>
      tpu.vector_store %arg6[%c0_15, %c0_16], %15 {strides = array<i32>} : memref<4x64xf32, #tpu.memory_space<vmem>>, vector<4x64xf32>,
      %cst_17 = arith.constant 0xFF800000 : f32
      %17 = vector.broadcast %cst_17 : f32 to vector<4x64xf32>
      %c0_18 = arith.constant 0 : index
      %c0_19 = arith.constant 0 : index
      %18 = vector.load %arg7[%c0_18, %c0_19] : memref<4x64xf32, #tpu.memory_space<vmem>>, vector<4x64xf32>
      tpu.vector_store %arg7[%c0_18, %c0_19], %17 {strides = array<i32>} : memref<4x64xf32, #tpu.memory_space<vmem>>, vector<4x64xf32>,
    } else {
    }
    %c0 = arith.constant 0 : index
    %c0_1 = arith.constant 0 : index
    %c0_2 = arith.constant 0 : index
    %3 = vector.load %arg2[%c0, %c0_1, %c0_2] : memref<4x64x256xf32, #tpu.memory_space<vmem>>, vector<4x64x256xf32>
    %cst = arith.constant dense<0.000000e+00> : vector<4x64xf32>
    %4 = vector.multi_reduction <add>, %3, %cst [2] : vector<4x64x256xf32> to vector<4x64xf32>
    %cst_3 = arith.constant dense<0xFF800000> : vector<4x64xf32>
    %5 = vector.multi_reduction <maximumf>, %3, %cst_3 [2] : vector<4x64x256xf32> to vector<4x64xf32>
    %c0_4 = arith.constant 0 : index
    %c0_5 = arith.constant 0 : index
    %6 = vector.load %arg6[%c0_4, %c0_5] : memref<4x64xf32, #tpu.memory_space<vmem>>, vector<4x64xf32>
    %7 = arith.addf %6, %4 : vector<4x64xf32>
    %c0_6 = arith.constant 0 : index
    %c0_7 = arith.constant 0 : index
    %8 = vector.load %arg6[%c0_6, %c0_7] : memref<4x64xf32, #tpu.memory_space<vmem>>, vector<4x64xf32>
    tpu.vector_store %arg6[%c0_6, %c0_7], %7 {strides = array<i32>} : memref<4x64xf32, #tpu.memory_space<vmem>>, vector<4x64xf32>,
    %c0_8 = arith.constant 0 : index
    %c0_9 = arith.constant 0 : index
    %9 = vector.load %arg7[%c0_8, %c0_9] : memref<4x64xf32, #tpu.memory_space<vmem>>, vector<4x64xf32>
    %10 = arith.maximumf %9, %5 : vector<4x64xf32>
    %c0_10 = arith.constant 0 : index
    %c0_11 = arith.constant 0 : index
    %11 = vector.load %arg7[%c0_10, %c0_11] : memref<4x64xf32, #tpu.memory_space<vmem>>, vector<4x64xf32>
    tpu.vector_store %arg7[%c0_10, %c0_11], %10 {strides = array<i32>} : memref<4x64xf32, #tpu.memory_space<vmem>>, vector<4x64xf32>,
    %c0_i32_12 = arith.constant 0 : i32
    %12 = arith.cmpi eq, %arg1, %c0_i32_12 : i32
    %13 = arith.extui %12 : i1 to i32
    %c0_i32_13 = arith.constant 0 : i32
    %14 = arith.cmpi ne, %13, %c0_i32_13 : i32
    scf.if %14 {
      %c0_14 = arith.constant 0 : index
      %c0_15 = arith.constant 0 : index
      %15 = vector.load %arg6[%c0_14, %c0_15] : memref<4x64xf32, #tpu.memory_space<vmem>>, vector<4x64xf32>
      %cst_16 = arith.constant 3.906250e-03 : f32
      %16 = vector.broadcast %cst_16 : f32 to vector<4x64xf32>
      %17 = arith.mulf %15, %16 : vector<4x64xf32>
      %c0_17 = arith.constant 0 : index
      %c0_18 = arith.constant 0 : index
      %18 = vector.load %arg7[%c0_17, %c0_18] : memref<4x64xf32, #tpu.memory_space<vmem>>, vector<4x64xf32>
      %19 = tpu.concatenate %17, %18 in 0 : vector<4x64xf32>, vector<4x64xf32> -> vector<8x64xf32>
      %c0_19 = arith.constant 0 : index
      %c0_20 = arith.constant 0 : index
      %20 = vector.load %arg3[%c0_19, %c0_20] : memref<64x4xf32, #tpu.memory_space<vmem>>, vector<64x4xf32>
      %cst_21 = arith.constant dense<0.000000e+00> : vector<8x4xf32>
      %21 = tpu.matmul %19, %20, %cst_21 {dimension_numbers = #tpu.dot_dimension_numbers<[1], [0], [0], [1], [0, 0, 1, 1], [], []>} : vector<8x64xf32>, vector<64x4xf32>, vector<8x4xf32> -> vector<8x4xf32>
      %cst_22 = arith.constant 0.000000e+00 : f32
      %22 = vector.broadcast %cst_22 : f32 to vector<8x4xf32>
      %23 = arith.maximumf %21, %22 : vector<8x4xf32>
      %24 = vector.extract_strided_slice %23 {offsets = [0, 0], sizes = [4, 4], strides = [1, 1]} : vector<8x4xf32> to vector<4x4xf32>
      %25 = vector.extract_strided_slice %23 {offsets = [4, 0], sizes = [4, 4], strides = [1, 1]} : vector<8x4xf32> to vector<4x4xf32>
      %26 = arith.addf %24, %25 : vector<4x4xf32>
      %c0_23 = arith.constant 0 : index
      %c0_24 = arith.constant 0 : index
      %27 = vector.load %arg4[%c0_23, %c0_24] : memref<4x64xf32, #tpu.memory_space<vmem>>, vector<4x64xf32>
      %cst_25 = arith.constant dense<0.000000e+00> : vector<4x64xf32>
      %28 = tpu.matmul %26, %27, %cst_25 {dimension_numbers = #tpu.dot_dimension_numbers<[1], [0], [0], [1], [0, 0, 1, 1], [], []>} : vector<4x4xf32>, vector<4x64xf32>, vector<4x64xf32> -> vector<4x64xf32>
      %29 = arith.negf %28 : vector<4x64xf32>
      %30 = math.exp %29 : vector<4x64xf32>
      %cst_26 = arith.constant 1.000000e+00 : f32
      %31 = vector.broadcast %cst_26 : f32 to vector<4x64xf32>
      %32 = arith.addf %31, %30 : vector<4x64xf32>
      %33 = arith.divf %31, %32 : vector<4x64xf32>
      %34 = vector.shape_cast %33 : vector<4x64xf32> to vector<4x1x64xf32>
      %c0_27 = arith.constant 0 : index
      %c0_28 = arith.constant 0 : index
      %c0_29 = arith.constant 0 : index
      %35 = vector.load %arg5[%c0_27, %c0_28, %c0_29] : memref<4x1x64xf32, #tpu.memory_space<vmem>>, vector<4x1x64xf32>
      tpu.vector_store %arg5[%c0_27, %c0_28, %c0_29], %34 {strides = array<i32>} : memref<4x1x64xf32, #tpu.memory_space<vmem>>, vector<4x1x64xf32>,
    } else {
    }
    return
  }
  func.func @transform_0(%arg0: i32, %arg1: i32) -> (i32, i32, i32) {
    %c0_i32 = arith.constant 0 : i32
    %c0_i32_0 = arith.constant 0 : i32
    return %arg0, %c0_i32, %arg1 : i32, i32, i32
  }
  func.func @transform_1(%arg0: i32, %arg1: i32) -> (i32, i32) {
    %c0_i32 = arith.constant 0 : i32
    %c0_i32_0 = arith.constant 0 : i32
    %c0_i32_1 = arith.constant 0 : i32
    return %c0_i32, %c0_i32_0 : i32, i32
  }
  func.func @transform_2(%arg0: i32, %arg1: i32) -> (i32, i32) {
    %c0_i32 = arith.constant 0 : i32
    %c0_i32_0 = arith.constant 0 : i32
    %c0_i32_1 = arith.constant 0 : i32
    return %c0_i32, %c0_i32_0 : i32, i32
  }
  func.func @transform_3(%arg0: i32, %arg1: i32) -> (i32, i32, i32) {
    %c0_i32 = arith.constant 0 : i32
    %c0_i32_0 = arith.constant 0 : i32
    %c0_i32_1 = arith.constant 0 : i32
    return %arg0, %c0_i32, %c0_i32_0 : i32, i32, i32
  }
}

</mosaic_0001>

<llo_original>
// kernel: tpu_custom_call.1
$region0: #{tpu_custom_call.1}
  #allocation0 [shape = 'u32[]', space=smem, size = 0x4, offset = 0x4, fixed_abs, tag = 'smem constant byte address 0x4 - core index']
  #allocation1 [shape = 'u32[144,128]{1,0:T(1,128)}', space=vmem, size = 0x12000, scoped, tag = 'internal scratch']
  #allocation2 [shape = 'f32[4,64]{1,0:T(4,128)}', space=vmem, size = 0x800, scoped, tag = 'scratch operand']
  #allocation3 [shape = 'f32[4,64]{1,0:T(4,128)}', space=vmem, size = 0x800, scoped, tag = 'scratch operand']
  %s0 = inlined_call_operand.hbm [shape: f32[4,64,256], index: 0, kind: input, shape index: {}]
  %s1 = inlined_call_operand.vmem [shape: f32[64,4], index: 1, kind: input, shape index: {}]
  %s2 = inlined_call_operand.vmem [shape: f32[4,64], index: 2, kind: input, shape index: {}]
  %s3 = inlined_call_operand.hbm [shape: f32[4,1,64], index: 3, kind: output, shape index: {}]
  %s4 = sld [smem:[#allocation0]]
  $region34: #{tpu_custom_call.1} parent=0
    _
  %s6 = ssub.s32 1, %s4
  %s7 = scalar_select 0, %s6, %s4
  $region1: #{tpu_custom_call.1} parent=0
    #allocation4 [shape = 'u8[262144]{0}', space=vmem, size = 0x40000, scoped, tag = 'input window, operand 0, single buffered']
    #allocation5 [shape = 's32[1]{0}', space=sflag, size = 0x4, scoped, tag = 'scoped memory for tpu_custom_call.1']
    #allocation6 [shape = 's32[1]{0}', space=sflag, size = 0x4, scoped, tag = 'scoped memory for tpu_custom_call.1']
    #allocation7 [shape = 'u8[2048]{0}', space=vmem, size = 0x800, scoped, tag = 'output window, operand 0, single buffered']
    %8 = vsyncpa [#allocation5], 0
    %9 = vsyncpa [#allocation6], 0
    // Predicated region
    $region2: #{tpu_custom_call.1} parent=1 // pred_check
      _
    $region3: #{tpu_custom_call.1} parent=1 // pred_check_branch
      %11 = sbr.rel (0) target = $region5
    $region4: #{tpu_custom_call.1} parent=1 // pred_region
      %s13 = ssub.s32 8192, 8192
      %14 = vsyncadd [#allocation5], %s13
      %s15 = sshll.u32 [#allocation4], 4
      %s16 = int_to_ptr.vmem [resolvable:$true] %s15
      %21 = dma.hbm_to_vmem [thread:$0]  %s0, 8192, %s16, [#allocation5], 256, 256, 16
    $region5: #{tpu_custom_call.1} parent=1 // pred_fallthru
      _
    // Predicated region
    $region6: #{tpu_custom_call.1} parent=1 // pred_check
      _
    $region7: #{tpu_custom_call.1} parent=1 // pred_check_branch
      %23 = sbr.rel (0) target = $region9
    $region8: #{tpu_custom_call.1} parent=1 // pred_region
      _
    $region9: #{tpu_custom_call.1} parent=1 // pred_fallthru
      _
    // Predicated region
    $region10: #{tpu_custom_call.1} parent=1 // pred_check
      _
    $region11: #{tpu_custom_call.1} parent=1 // pred_check_branch
      %25 = sbr.rel (0) target = $region13
    $region12: #{tpu_custom_call.1} parent=1 // pred_region
      _
    $region13: #{tpu_custom_call.1} parent=1 // pred_fallthru
      _
    // Predicated region
    $region14: #{tpu_custom_call.1} parent=1 // pred_check
      _
    $region15: #{tpu_custom_call.1} parent=1 // pred_check_branch
      %27 = sbr.rel (0) target = $region17
    $region16: #{tpu_custom_call.1} parent=1 // pred_region
      %28 = dma.done [#allocation5], 8192
    $region17: #{tpu_custom_call.1} parent=1 // pred_fallthru
      _
    %p29 = scmp.eq.s32.totalorder 0, 0
    // Predicated region
    $region18: #{tpu_custom_call.1} parent=1 // pred_check
      %p30 = pneg %p29
    $region19: #{tpu_custom_call.1} parent=1 // pred_check_branch
      %32 = sbr.rel (%p30) target = $region21
    $region20: #{tpu_custom_call.1} parent=1 // pred_region
      %vm33 = vcmask 519168
      %34 = vst.msk [vmem:[#allocation2] sm:$0xf] %vm33, 0.0
      %35 = vst.msk [vmem:[#allocation3] sm:$0xf] %vm33, -inf
    $region21: #{tpu_custom_call.1} parent=1 // pred_fallthru
      _
    %v36 = vld [vmem:[#allocation4] sm:$0xff]
    %v37 = vld [vmem:[#allocation4 + $0x8] sm:$0xff]
    %v38 = vld [vmem:[#allocation4 + $0x10] sm:$0xff]
    %v39 = vld [vmem:[#allocation4 + $0x18] sm:$0xff]
    %v40 = vld [vmem:[#allocation4 + $0x20] sm:$0xff]
    %v41 = vld [vmem:[#allocation4 + $0x28] sm:$0xff]
    %v42 = vld [vmem:[#allocation4 + $0x30] sm:$0xff]
    %v43 = vld [vmem:[#allocation4 + $0x38] sm:$0xff]
    %v44 = vld [vmem:[#allocation4 + $0x40] sm:$0xff]
    %v45 = vld [vmem:[#allocation4 + $0x48] sm:$0xff]
    %v46 = vld [vmem:[#allocation4 + $0x50] sm:$0xff]
    %v47 = vld [vmem:[#allocation4 + $0x58] sm:$0xff]
    %v48 = vld [vmem:[#allocation4 + $0x60] sm:$0xff]
    %v49 = vld [vmem:[#allocation4 + $0x68] sm:$0xff]
    %v50 = vld [vmem:[#allocation4 + $0x70] sm:$0xff]
    %v51 = vld [vmem:[#allocation4 + $0x78] sm:$0xff]
    %v52 = vld [vmem:[#allocation4 + $0x80] sm:$0xff]
    %v53 = vld [vmem:[#allocation4 + $0x88] sm:$0xff]
    %v54 = vld [vmem:[#allocation4 + $0x90] sm:$0xff]
    %v55 = vld [vmem:[#allocation4 + $0x98] sm:$0xff]
    %v56 = vld [vmem:[#allocation4 + $0xa0] sm:$0xff]
    %v57 = vld [vmem:[#allocation4 + $0xa8] sm:$0xff]
    %v58 = vld [vmem:[#allocation4 + $0xb0] sm:$0xff]
    %v59 = vld [vmem:[#allocation4 + $0xb8] sm:$0xff]
    %v60 = vld [vmem:[#allocation4 + $0xc0] sm:$0xff]
    %v61 = vld [vmem:[#allocation4 + $0xc8] sm:$0xff]
    %v62 = vld [vmem:[#allocation4 + $0xd0] sm:$0xff]
    %v63 = vld [vmem:[#allocation4 + $0xd8] sm:$0xff]
    %v64 = vld [vmem:[#allocation4 + $0xe0] sm:$0xff]
    %v65 = vld [vmem:[#allocation4 + $0xe8] sm:$0xff]
    %v66 = vld [vmem:[#allocation4 + $0xf0] sm:$0xff]
    %v67 = vld [vmem:[#allocation4 + $0xf8] sm:$0xff]
    %v68 = vld [vmem:[#allocation4 + $0x100] sm:$0xff]
    %v69 = vld [vmem:[#allocation4 + $0x108] sm:$0xff]
    %v70 = vld [vmem:[#allocation4 + $0x110] sm:$0xff]
    %v71 = vld [vmem:[#allocation4 + $0x118] sm:$0xff]
    %v72 = vld [vmem:[#allocation4 + $0x120] sm:$0xff]
    %v73 = vld [vmem:[#allocation4 + $0x128] sm:$0xff]
    %v74 = vld [vmem:[#allocation4 + $0x130] sm:$0xff]
    %v75 = vld [vmem:[#allocation4 + $0x138] sm:$0xff]
    %v76 = vld [vmem:[#allocation4 + $0x140] sm:$0xff]
    %v77 = vld [vmem:[#allocation4 + $0x148] sm:$0xff]
    %v78 = vld [vmem:[#allocation4 + $0x150] sm:$0xff]
    %v79 = vld [vmem:[#allocation4 + $0x158] sm:$0xff]
    %v80 = vld [vmem:[#allocation4 + $0x160] sm:$0xff]
    %v81 = vld [vmem:[#allocation4 + $0x168] sm:$0xff]
    %v82 = vld [vmem:[#allocation4 + $0x170] sm:$0xff]
    %v83 = vld [vmem:[#allocation4 + $0x178] sm:$0xff]
    %v84 = vld [vmem:[#allocation4 + $0x180] sm:$0xff]
    %v85 = vld [vmem:[#allocation4 + $0x188] sm:$0xff]
    %v86 = vld [vmem:[#allocation4 + $0x190] sm:$0xff]
    %v87 = vld [vmem:[#allocation4 + $0x198] sm:$0xff]
    %v88 = vld [vmem:[#allocation4 + $0x1a0] sm:$0xff]
    %v89 = vld [vmem:[#allocation4 + $0x1a8] sm:$0xff]
    %v90 = vld [vmem:[#allocation4 + $0x1b0] sm:$0xff]
    %v91 = vld [vmem:[#allocation4 + $0x1b8] sm:$0xff]
    %v92 = vld [vmem:[#allocation4 + $0x1c0] sm:$0xff]
    %v93 = vld [vmem:[#allocation4 + $0x1c8] sm:$0xff]
    %v94 = vld [vmem:[#allocation4 + $0x1d0] sm:$0xff]
    %v95 = vld [vmem:[#allocation4 + $0x1d8] sm:$0xff]
    %v96 = vld [vmem:[#allocation4 + $0x1e0] sm:$0xff]
    %v97 = vld [vmem:[#allocation4 + $0x1e8] sm:$0xff]
    %v98 = vld [vmem:[#allocation4 + $0x1f0] sm:$0xff]
    %v99 = vld [vmem:[#allocation4 + $0x1f8] sm:$0xff]
    %v100 = vadd.f32 %v36, %v37
    %101 = vadd.xlane.f32.xlu0 %v100
    %v102 = vpop.xlane.xlu0 %101
    %v103 = vadd.f32 %v38, %v39
    %104 = vadd.xlane.f32.xlu0 %v103
    %v105 = vpop.xlane.xlu0 %104
    %v106 = vadd.f32 %v40, %v41
    %107 = vadd.xlane.f32.xlu0 %v106
    %v108 = vpop.xlane.xlu0 %107
    %v109 = vadd.f32 %v42, %v43
    %110 = vadd.xlane.f32.xlu0 %v109
    %v111 = vpop.xlane.xlu0 %110
    %v112 = vadd.f32 %v44, %v45
    %113 = vadd.xlane.f32.xlu0 %v112
    %v114 = vpop.xlane.xlu0 %113
    %v115 = vadd.f32 %v46, %v47
    %116 = vadd.xlane.f32.xlu0 %v115
    %v117 = vpop.xlane.xlu0 %116
    %v118 = vadd.f32 %v48, %v49
    %119 = vadd.xlane.f32.xlu0 %v118
    %v120 = vpop.xlane.xlu0 %119
    %v121 = vadd.f32 %v50, %v51
    %122 = vadd.xlane.f32.xlu0 %v121
    %v123 = vpop.xlane.xlu0 %122
    %v124 = vadd.f32 %v52, %v53
    %125 = vadd.xlane.f32.xlu0 %v124
    %v126 = vpop.xlane.xlu0 %125
    %v127 = vadd.f32 %v54, %v55
    %128 = vadd.xlane.f32.xlu0 %v127
    %v129 = vpop.xlane.xlu0 %128
    %v130 = vadd.f32 %v56, %v57
    %131 = vadd.xlane.f32.xlu0 %v130
    %v132 = vpop.xlane.xlu0 %131
    %v133 = vadd.f32 %v58, %v59
    %134 = vadd.xlane.f32.xlu0 %v133
    %v135 = vpop.xlane.xlu0 %134
    %v136 = vadd.f32 %v60, %v61
    %137 = vadd.xlane.f32.xlu0 %v136
    %v138 = vpop.xlane.xlu0 %137
    %v139 = vadd.f32 %v62, %v63
    %140 = vadd.xlane.f32.xlu0 %v139
    %v141 = vpop.xlane.xlu0 %140
    %v142 = vadd.f32 %v64, %v65
    %143 = vadd.xlane.f32.xlu0 %v142
    %v144 = vpop.xlane.xlu0 %143
    %v145 = vadd.f32 %v66, %v67
    %146 = vadd.xlane.f32.xlu0 %v145
    %v147 = vpop.xlane.xlu0 %146
    %v148 = vadd.f32 %v68, %v69
    %149 = vadd.xlane.f32.xlu0 %v148
    %v150 = vpop.xlane.xlu0 %149
    %v151 = vadd.f32 %v70, %v71
    %152 = vadd.xlane.f32.xlu0 %v151
    %v153 = vpop.xlane.xlu0 %152
    %v154 = vadd.f32 %v72, %v73
    %155 = vadd.xlane.f32.xlu0 %v154
    %v156 = vpop.xlane.xlu0 %155
    %v157 = vadd.f32 %v74, %v75
    %158 = vadd.xlane.f32.xlu0 %v157
    %v159 = vpop.xlane.xlu0 %158
    %v160 = vadd.f32 %v76, %v77
    %161 = vadd.xlane.f32.xlu0 %v160
    %v162 = vpop.xlane.xlu0 %161
    %v163 = vadd.f32 %v78, %v79
    %164 = vadd.xlane.f32.xlu0 %v163
    %v165 = vpop.xlane.xlu0 %164
    %v166 = vadd.f32 %v80, %v81
    %167 = vadd.xlane.f32.xlu0 %v166
    %v168 = vpop.xlane.xlu0 %167
    %v169 = vadd.f32 %v82, %v83
    %170 = vadd.xlane.f32.xlu0 %v169
    %v171 = vpop.xlane.xlu0 %170
    %v172 = vadd.f32 %v84, %v85
    %173 = vadd.xlane.f32.xlu0 %v172
    %v174 = vpop.xlane.xlu0 %173
    %v175 = vadd.f32 %v86, %v87
    %176 = vadd.xlane.f32.xlu0 %v175
    %v177 = vpop.xlane.xlu0 %176
    %v178 = vadd.f32 %v88, %v89
    %179 = vadd.xlane.f32.xlu0 %v178
    %v180 = vpop.xlane.xlu0 %179
    %v181 = vadd.f32 %v90, %v91
    %182 = vadd.xlane.f32.xlu0 %v181
    %v183 = vpop.xlane.xlu0 %182
    %v184 = vadd.f32 %v92, %v93
    %185 = vadd.xlane.f32.xlu0 %v184
    %v186 = vpop.xlane.xlu0 %185
    %v187 = vadd.f32 %v94, %v95
    %188 = vadd.xlane.f32.xlu0 %v187
    %v189 = vpop.xlane.xlu0 %188
    %v190 = vadd.f32 %v96, %v97
    %191 = vadd.xlane.f32.xlu0 %v190
    %v192 = vpop.xlane.xlu0 %191
    %v193 = vadd.f32 %v98, %v99
    %194 = vadd.xlane.f32.xlu0 %v193
    %v195 = vpop.xlane.xlu0 %194
    %v196 = vmax.f32 %v36, %v37
    %197 = vmax.xlane.f32.xlu0 %v196
    %v198 = vpop.xlane.xlu0 %197
    %v199 = vmax.f32 %v38, %v39
    %200 = vmax.xlane.f32.xlu0 %v199
    %v201 = vpop.xlane.xlu0 %200
    %v202 = vmax.f32 %v40, %v41
    %203 = vmax.xlane.f32.xlu0 %v202
    %v204 = vpop.xlane.xlu0 %203
    %v205 = vmax.f32 %v42, %v43
    %206 = vmax.xlane.f32.xlu0 %v205
    %v207 = vpop.xlane.xlu0 %206
    %v208 = vmax.f32 %v44, %v45
    %209 = vmax.xlane.f32.xlu0 %v208
    %v210 = vpop.xlane.xlu0 %209
    %v211 = vmax.f32 %v46, %v47
    %212 = vmax.xlane.f32.xlu0 %v211
    %v213 = vpop.xlane.xlu0 %212
    %v214 = vmax.f32 %v48, %v49
    %215 = vmax.xlane.f32.xlu0 %v214
    %v216 = vpop.xlane.xlu0 %215
    %v217 = vmax.f32 %v50, %v51
    %218 = vmax.xlane.f32.xlu0 %v217
    %v219 = vpop.xlane.xlu0 %218
    %v220 = vmax.f32 %v52, %v53
    %221 = vmax.xlane.f32.xlu0 %v220
    %v222 = vpop.xlane.xlu0 %221
    %v223 = vmax.f32 %v54, %v55
    %224 = vmax.xlane.f32.xlu0 %v223
    %v225 = vpop.xlane.xlu0 %224
    %v226 = vmax.f32 %v56, %v57
    %227 = vmax.xlane.f32.xlu0 %v226
    %v228 = vpop.xlane.xlu0 %227
    %v229 = vmax.f32 %v58, %v59
    %230 = vmax.xlane.f32.xlu0 %v229
    %v231 = vpop.xlane.xlu0 %230
    %v232 = vmax.f32 %v60, %v61
    %233 = vmax.xlane.f32.xlu0 %v232
    %v234 = vpop.xlane.xlu0 %233
    %v235 = vmax.f32 %v62, %v63
    %236 = vmax.xlane.f32.xlu0 %v235
    %v237 = vpop.xlane.xlu0 %236
    %v238 = vmax.f32 %v64, %v65
    %239 = vmax.xlane.f32.xlu0 %v238
    %v240 = vpop.xlane.xlu0 %239
    %v241 = vmax.f32 %v66, %v67
    %242 = vmax.xlane.f32.xlu0 %v241
    %v243 = vpop.xlane.xlu0 %242
    %v244 = vmax.f32 %v68, %v69
    %245 = vmax.xlane.f32.xlu0 %v244
    %v246 = vpop.xlane.xlu0 %245
    %v247 = vmax.f32 %v70, %v71
    %248 = vmax.xlane.f32.xlu0 %v247
    %v249 = vpop.xlane.xlu0 %248
    %v250 = vmax.f32 %v72, %v73
    %251 = vmax.xlane.f32.xlu0 %v250
    %v252 = vpop.xlane.xlu0 %251
    %v253 = vmax.f32 %v74, %v75
    %254 = vmax.xlane.f32.xlu0 %v253
    %v255 = vpop.xlane.xlu0 %254
    %v256 = vmax.f32 %v76, %v77
    %257 = vmax.xlane.f32.xlu0 %v256
    %v258 = vpop.xlane.xlu0 %257
    %v259 = vmax.f32 %v78, %v79
    %260 = vmax.xlane.f32.xlu0 %v259
    %v261 = vpop.xlane.xlu0 %260
    %v262 = vmax.f32 %v80, %v81
    %263 = vmax.xlane.f32.xlu0 %v262
    %v264 = vpop.xlane.xlu0 %263
    %v265 = vmax.f32 %v82, %v83
    %266 = vmax.xlane.f32.xlu0 %v265
    %v267 = vpop.xlane.xlu0 %266
    %v268 = vmax.f32 %v84, %v85
    %269 = vmax.xlane.f32.xlu0 %v268
    %v270 = vpop.xlane.xlu0 %269
    %v271 = vmax.f32 %v86, %v87
    %272 = vmax.xlane.f32.xlu0 %v271
    %v273 = vpop.xlane.xlu0 %272
    %v274 = vmax.f32 %v88, %v89
    %275 = vmax.xlane.f32.xlu0 %v274
    %v276 = vpop.xlane.xlu0 %275
    %v277 = vmax.f32 %v90, %v91
    %278 = vmax.xlane.f32.xlu0 %v277
    %v279 = vpop.xlane.xlu0 %278
    %v280 = vmax.f32 %v92, %v93
    %281 = vmax.xlane.f32.xlu0 %v280
    %v282 = vpop.xlane.xlu0 %281
    %v283 = vmax.f32 %v94, %v95
    %284 = vmax.xlane.f32.xlu0 %v283
    %v285 = vpop.xlane.xlu0 %284
    %v286 = vmax.f32 %v96, %v97
    %287 = vmax.xlane.f32.xlu0 %v286
    %v288 = vpop.xlane.xlu0 %287
    %v289 = vmax.f32 %v98, %v99
    %290 = vmax.xlane.f32.xlu0 %v289
    %v291 = vpop.xlane.xlu0 %290
    %v292 = vld [vmem:[#allocation2] sm:$0xf]
    %v325 = vlaneseq
    %v326 = vand.u32 %v325, 127
    %v327 = vlaneseq
    %v328 = vshrl.u32 %v327, 7
    %v329 = vsub.s32 %v326, %v328
    %v330 = vrot.slane %v102, %v329
    %v331 = vadd.s32 %v326, 4294967288
    %v332 = vlaneseq
    %v333 = vshrl.u32 %v332, 7
    %v334 = vsub.s32 %v331, %v333
    %v335 = vrot.slane %v105, %v334
    %vm336 = vcmask 130112
    %v337 = vsel %vm336, %v335, %v330
    %v338 = vadd.s32 %v326, 4294967280
    %v339 = vlaneseq
    %v340 = vshrl.u32 %v339, 7
    %v341 = vsub.s32 %v338, %v340
    %v342 = vrot.slane %v108, %v341
    %vm343 = vcmask 195712
    %v344 = vsel %vm343, %v342, %v337
    %v345 = vadd.s32 %v326, 4294967272
    %v346 = vlaneseq
    %v347 = vshrl.u32 %v346, 7
    %v348 = vsub.s32 %v345, %v347
    %v349 = vrot.slane %v111, %v348
    %vm350 = vcmask 261312
    %v351 = vsel %vm350, %v349, %v344
    %v352 = vadd.s32 %v326, 4294967264
    %v353 = vlaneseq
    %v354 = vshrl.u32 %v353, 7
    %v355 = vsub.s32 %v352, %v354
    %v356 = vrot.slane %v114, %v355
    %vm357 = vcmask 326912
    %v358 = vsel %vm357, %v356, %v351
    %v359 = vadd.s32 %v326, 4294967256
    %v360 = vlaneseq
    %v361 = vshrl.u32 %v360, 7
    %v362 = vsub.s32 %v359, %v361
    %v363 = vrot.slane %v117, %v362
    %vm364 = vcmask 392512
    %v365 = vsel %vm364, %v363, %v358
    %v366 = vadd.s32 %v326, 4294967248
    %v367 = vlaneseq
    %v368 = vshrl.u32 %v367, 7
    %v369 = vsub.s32 %v366, %v368
    %v370 = vrot.slane %v120, %v369
    %vm371 = vcmask 458112
    %v372 = vsel %vm371, %v370, %v365
    %v373 = vadd.s32 %v326, 4294967240
    %v374 = vlaneseq
    %v375 = vshrl.u32 %v374, 7
    %v376 = vsub.s32 %v373, %v375
    %v377 = vrot.slane %v123, %v376
    %vm378 = vcmask 523712
    %v379 = vsel %vm378, %v377, %v372
    %v380 = vlaneseq
    %v381 = vshrl.u32 %v380, 7
    %v382 = vsub.s32 %v326, %v381
    %v383 = vrot.slane %v126, %v382
    %v384 = vlaneseq
    %v385 = vshrl.u32 %v384, 7
    %v386 = vsub.s32 %v331, %v385
    %v387 = vrot.slane %v129, %v386
    %v388 = vsel %vm336, %v387, %v383
    %v389 = vlaneseq
    %v390 = vshrl.u32 %v389, 7
    %v391 = vsub.s32 %v338, %v390
    %v392 = vrot.slane %v132, %v391
    %v393 = vsel %vm343, %v392, %v388
    %v394 = vlaneseq
    %v395 = vshrl.u32 %v394, 7
    %v396 = vsub.s32 %v345, %v395
    %v397 = vrot.slane %v135, %v396
    %v398 = vsel %vm350, %v397, %v393
    %v399 = vlaneseq
    %v400 = vshrl.u32 %v399, 7
    %v401 = vsub.s32 %v352, %v400
    %v402 = vrot.slane %v138, %v401
    %v403 = vsel %vm357, %v402, %v398
    %v404 = vlaneseq
    %v405 = vshrl.u32 %v404, 7
    %v406 = vsub.s32 %v359, %v405
    %v407 = vrot.slane %v141, %v406
    %v408 = vsel %vm364, %v407, %v403
    %v409 = vlaneseq
    %v410 = vshrl.u32 %v409, 7
    %v411 = vsub.s32 %v366, %v410
    %v412 = vrot.slane %v144, %v411
    %v413 = vsel %vm371, %v412, %v408
    %v414 = vlaneseq
    %v415 = vshrl.u32 %v414, 7
    %v416 = vsub.s32 %v373, %v415
    %v417 = vrot.slane %v147, %v416
    %v418 = vsel %vm378, %v417, %v413
    %v419 = vlaneseq
    %v420 = vshrl.u32 %v419, 7
    %v421 = vsub.s32 %v326, %v420
    %v422 = vrot.slane %v150, %v421
    %v423 = vlaneseq
    %v424 = vshrl.u32 %v423, 7
    %v425 = vsub.s32 %v331, %v424
    %v426 = vrot.slane %v153, %v425
    %v427 = vsel %vm336, %v426, %v422
    %v428 = vlaneseq
    %v429 = vshrl.u32 %v428, 7
    %v430 = vsub.s32 %v338, %v429
    %v431 = vrot.slane %v156, %v430
    %v432 = vsel %vm343, %v431, %v427
    %v433 = vlaneseq
    %v434 = vshrl.u32 %v433, 7
    %v435 = vsub.s32 %v345, %v434
    %v436 = vrot.slane %v159, %v435
    %v437 = vsel %vm350, %v436, %v432
    %v438 = vlaneseq
    %v439 = vshrl.u32 %v438, 7
    %v440 = vsub.s32 %v352, %v439
    %v441 = vrot.slane %v162, %v440
    %v442 = vsel %vm357, %v441, %v437
    %v443 = vlaneseq
    %v444 = vshrl.u32 %v443, 7
    %v445 = vsub.s32 %v359, %v444
    %v446 = vrot.slane %v165, %v445
    %v447 = vsel %vm364, %v446, %v442
    %v448 = vlaneseq
    %v449 = vshrl.u32 %v448, 7
    %v450 = vsub.s32 %v366, %v449
    %v451 = vrot.slane %v168, %v450
    %v452 = vsel %vm371, %v451, %v447
    %v453 = vlaneseq
    %v454 = vshrl.u32 %v453, 7
    %v455 = vsub.s32 %v373, %v454
    %v456 = vrot.slane %v171, %v455
    %v457 = vsel %vm378, %v456, %v452
    %v458 = vlaneseq
    %v459 = vshrl.u32 %v458, 7
    %v460 = vsub.s32 %v326, %v459
    %v461 = vrot.slane %v174, %v460
    %v462 = vlaneseq
    %v463 = vshrl.u32 %v462, 7
    %v464 = vsub.s32 %v331, %v463
    %v465 = vrot.slane %v177, %v464
    %v466 = vsel %vm336, %v465, %v461
    %v467 = vlaneseq
    %v468 = vshrl.u32 %v467, 7
    %v469 = vsub.s32 %v338, %v468
    %v470 = vrot.slane %v180, %v469
    %v471 = vsel %vm343, %v470, %v466
    %v472 = vlaneseq
    %v473 = vshrl.u32 %v472, 7
    %v474 = vsub.s32 %v345, %v473
    %v475 = vrot.slane %v183, %v474
    %v476 = vsel %vm350, %v475, %v471
    %v477 = vlaneseq
    %v478 = vshrl.u32 %v477, 7
    %v479 = vsub.s32 %v352, %v478
    %v480 = vrot.slane %v186, %v479
    %v481 = vsel %vm357, %v480, %v476
    %v482 = vlaneseq
    %v483 = vshrl.u32 %v482, 7
    %v484 = vsub.s32 %v359, %v483
    %v485 = vrot.slane %v189, %v484
    %v486 = vsel %vm364, %v485, %v481
    %v487 = vlaneseq
    %v488 = vshrl.u32 %v487, 7
    %v489 = vsub.s32 %v366, %v488
    %v490 = vrot.slane %v192, %v489
    %v491 = vsel %vm371, %v490, %v486
    %v492 = vlaneseq
    %v493 = vshrl.u32 %v492, 7
    %v494 = vsub.s32 %v373, %v493
    %v495 = vrot.slane %v195, %v494
    %v496 = vsel %vm378, %v495, %v491
    %vm497 = vcmask 1041409
    %v498 = vsel %vm497, %v418, %v379
    %vm499 = vcmask 1042434
    %v500 = vsel %vm499, %v457, %v498
    %vm501 = vcmask 1043459
    %v502 = vsel %vm501, %v496, %v500
    %v504 = vadd.f32 %v292, %v502
    %vm505 = vcmask 519168
    %506 = vst.msk [vmem:[#allocation2] sm:$0xf] %vm505, %v504
    %v507 = vld [vmem:[#allocation3] sm:$0xf]
    %v540 = vlaneseq
    %v541 = vshrl.u32 %v540, 7
    %v542 = vsub.s32 %v326, %v541
    %v543 = vrot.slane %v198, %v542
    %v544 = vlaneseq
    %v545 = vshrl.u32 %v544, 7
    %v546 = vsub.s32 %v331, %v545
    %v547 = vrot.slane %v201, %v546
    %v548 = vsel %vm336, %v547, %v543
    %v549 = vlaneseq
    %v550 = vshrl.u32 %v549, 7
    %v551 = vsub.s32 %v338, %v550
    %v552 = vrot.slane %v204, %v551
    %v553 = vsel %vm343, %v552, %v548
    %v554 = vlaneseq
    %v555 = vshrl.u32 %v554, 7
    %v556 = vsub.s32 %v345, %v555
    %v557 = vrot.slane %v207, %v556
    %v558 = vsel %vm350, %v557, %v553
    %v559 = vlaneseq
    %v560 = vshrl.u32 %v559, 7
    %v561 = vsub.s32 %v352, %v560
    %v562 = vrot.slane %v210, %v561
    %v563 = vsel %vm357, %v562, %v558
    %v564 = vlaneseq
    %v565 = vshrl.u32 %v564, 7
    %v566 = vsub.s32 %v359, %v565
    %v567 = vrot.slane %v213, %v566
    %v568 = vsel %vm364, %v567, %v563
    %v569 = vlaneseq
    %v570 = vshrl.u32 %v569, 7
    %v571 = vsub.s32 %v366, %v570
    %v572 = vrot.slane %v216, %v571
    %v573 = vsel %vm371, %v572, %v568
    %v574 = vlaneseq
    %v575 = vshrl.u32 %v574, 7
    %v576 = vsub.s32 %v373, %v575
    %v577 = vrot.slane %v219, %v576
    %v578 = vsel %vm378, %v577, %v573
    %v579 = vlaneseq
    %v580 = vshrl.u32 %v579, 7
    %v581 = vsub.s32 %v326, %v580
    %v582 = vrot.slane %v222, %v581
    %v583 = vlaneseq
    %v584 = vshrl.u32 %v583, 7
    %v585 = vsub.s32 %v331, %v584
    %v586 = vrot.slane %v225, %v585
    %v587 = vsel %vm336, %v586, %v582
    %v588 = vlaneseq
    %v589 = vshrl.u32 %v588, 7
    %v590 = vsub.s32 %v338, %v589
    %v591 = vrot.slane %v228, %v590
    %v592 = vsel %vm343, %v591, %v587
    %v593 = vlaneseq
    %v594 = vshrl.u32 %v593, 7
    %v595 = vsub.s32 %v345, %v594
    %v596 = vrot.slane %v231, %v595
    %v597 = vsel %vm350, %v596, %v592
    %v598 = vlaneseq
    %v599 = vshrl.u32 %v598, 7
    %v600 = vsub.s32 %v352, %v599
    %v601 = vrot.slane %v234, %v600
    %v602 = vsel %vm357, %v601, %v597
    %v603 = vlaneseq
    %v604 = vshrl.u32 %v603, 7
    %v605 = vsub.s32 %v359, %v604
    %v606 = vrot.slane %v237, %v605
    %v607 = vsel %vm364, %v606, %v602
    %v608 = vlaneseq
    %v609 = vshrl.u32 %v608, 7
    %v610 = vsub.s32 %v366, %v609
    %v611 = vrot.slane %v240, %v610
    %v612 = vsel %vm371, %v611, %v607
    %v613 = vlaneseq
    %v614 = vshrl.u32 %v613, 7
    %v615 = vsub.s32 %v373, %v614
    %v616 = vrot.slane %v243, %v615
    %v617 = vsel %vm378, %v616, %v612
    %v618 = vlaneseq
    %v619 = vshrl.u32 %v618, 7
    %v620 = vsub.s32 %v326, %v619
    %v621 = vrot.slane %v246, %v620
    %v622 = vlaneseq
    %v623 = vshrl.u32 %v622, 7
    %v624 = vsub.s32 %v331, %v623
    %v625 = vrot.slane %v249, %v624
    %v626 = vsel %vm336, %v625, %v621
    %v627 = vlaneseq
    %v628 = vshrl.u32 %v627, 7
    %v629 = vsub.s32 %v338, %v628
    %v630 = vrot.slane %v252, %v629
    %v631 = vsel %vm343, %v630, %v626
    %v632 = vlaneseq
    %v633 = vshrl.u32 %v632, 7
    %v634 = vsub.s32 %v345, %v633
    %v635 = vrot.slane %v255, %v634
    %v636 = vsel %vm350, %v635, %v631
    %v637 = vlaneseq
    %v638 = vshrl.u32 %v637, 7
    %v639 = vsub.s32 %v352, %v638
    %v640 = vrot.slane %v258, %v639
    %v641 = vsel %vm357, %v640, %v636
    %v642 = vlaneseq
    %v643 = vshrl.u32 %v642, 7
    %v644 = vsub.s32 %v359, %v643
    %v645 = vrot.slane %v261, %v644
    %v646 = vsel %vm364, %v645, %v641
    %v647 = vlaneseq
    %v648 = vshrl.u32 %v647, 7
    %v649 = vsub.s32 %v366, %v648
    %v650 = vrot.slane %v264, %v649
    %v651 = vsel %vm371, %v650, %v646
    %v652 = vlaneseq
    %v653 = vshrl.u32 %v652, 7
    %v654 = vsub.s32 %v373, %v653
    %v655 = vrot.slane %v267, %v654
    %v656 = vsel %vm378, %v655, %v651
    %v657 = vlaneseq
    %v658 = vshrl.u32 %v657, 7
    %v659 = vsub.s32 %v326, %v658
    %v660 = vrot.slane %v270, %v659
    %v661 = vlaneseq
    %v662 = vshrl.u32 %v661, 7
    %v663 = vsub.s32 %v331, %v662
    %v664 = vrot.slane %v273, %v663
    %v665 = vsel %vm336, %v664, %v660
    %v666 = vlaneseq
    %v667 = vshrl.u32 %v666, 7
    %v668 = vsub.s32 %v338, %v667
    %v669 = vrot.slane %v276, %v668
    %v670 = vsel %vm343, %v669, %v665
    %v671 = vlaneseq
    %v672 = vshrl.u32 %v671, 7
    %v673 = vsub.s32 %v345, %v672
    %v674 = vrot.slane %v279, %v673
    %v675 = vsel %vm350, %v674, %v670
    %v676 = vlaneseq
    %v677 = vshrl.u32 %v676, 7
    %v678 = vsub.s32 %v352, %v677
    %v679 = vrot.slane %v282, %v678
    %v680 = vsel %vm357, %v679, %v675
    %v681 = vlaneseq
    %v682 = vshrl.u32 %v681, 7
    %v683 = vsub.s32 %v359, %v682
    %v684 = vrot.slane %v285, %v683
    %v685 = vsel %vm364, %v684, %v680
    %v686 = vlaneseq
    %v687 = vshrl.u32 %v686, 7
    %v688 = vsub.s32 %v366, %v687
    %v689 = vrot.slane %v288, %v688
    %v690 = vsel %vm371, %v689, %v685
    %v691 = vlaneseq
    %v692 = vshrl.u32 %v691, 7
    %v693 = vsub.s32 %v373, %v692
    %v694 = vrot.slane %v291, %v693
    %v695 = vsel %vm378, %v694, %v690
    %v696 = vsel %vm497, %v617, %v578
    %v697 = vsel %vm499, %v656, %v696
    %v698 = vsel %vm501, %v695, %v697
    %v700 = vmax.f32 %v507, %v698
    %701 = vst.msk [vmem:[#allocation3] sm:$0xf] %vm505, %v700
    // Predicated region
    $region22: #{tpu_custom_call.1} parent=1 // pred_check
      %p702 = pneg %p29
    $region23: #{tpu_custom_call.1} parent=1 // pred_check_branch
      %704 = sbr.rel (%p702) target = $region25
    $region24: #{tpu_custom_call.1} parent=1 // pred_region
      %v705 = vld [vmem:[#allocation2] sm:$0xf]
      %v706 = vmul.f32 %v705, 0.00390625
      %v707 = vld [vmem:[#allocation3] sm:$0xf]
      %v709 = vrot.slane %v707, 4
      %vm711 = vcmask 1043456
      %v712 = vsel %vm711, %v706, %v709
      %v713 = vld [vmem:[%s1] sm:$0xff]
      %v714 = vld [vmem:[%s1 + $0x8] sm:$0xff]
      %v715 = vld [vmem:[%s1 + $0x10] sm:$0xff]
      %v716 = vld [vmem:[%s1 + $0x18] sm:$0xff]
      %v717 = vld [vmem:[%s1 + $0x20] sm:$0xff]
      %v718 = vld [vmem:[%s1 + $0x28] sm:$0xff]
      %v719 = vld [vmem:[%s1 + $0x30] sm:$0xff]
      %v720 = vld [vmem:[%s1 + $0x38] sm:$0xff]
      %vm721 = vcmask 523264
      %v723 = vsel %vm721, %v712, 0
      %725 = vmatprep.subr.mxu0 0.0
      %726 = vmatpush1.msra.mxu0 0.0
      %727 = vmatprep.subr.mxu0 0.0
      %728 = vmatpush1.msra.mxu0 0.0
      %729 = vmatprep.subr.mxu0 0.0
      %730 = vmatpush1.msra.mxu0 0.0
      %731 = vmatprep.subr.mxu0 0.0
      %732 = vmatpush1.msra.mxu0 0.0
      %733 = vmatprep.subr.mxu0 0.0
      %734 = vmatpush1.msra.mxu0 0.0
      %735 = vmatprep.subr.mxu0 0.0
      %736 = vmatpush1.msra.mxu0 0.0
      %737 = vmatprep.subr.mxu0 0.0
      %738 = vmatpush1.msra.mxu0 0.0
      %739 = vmatprep.subr.mxu0 0.0
      %740 = vmatpush1.msra.mxu0 0.0
      %741 = vmatprep.subr.mxu0 0.0
      %742 = vmatpush1.msra.mxu0 %v720
      %743 = vmatprep.subr.mxu0 0.0
      %744 = vmatpush1.msra.mxu0 %v719
      %745 = vmatprep.subr.mxu0 0.0
      %746 = vmatpush1.msra.mxu0 %v718
      %747 = vmatprep.subr.mxu0 0.0
      %748 = vmatpush1.msra.mxu0 %v717
      %749 = vmatprep.subr.mxu0 0.0
      %750 = vmatpush1.msra.mxu0 %v716
      %751 = vmatprep.subr.mxu0 0.0
      %752 = vmatpush1.msra.mxu0 %v715
      %753 = vmatprep.subr.mxu0 0.0
      %754 = vmatpush1.msra.mxu0 %v714
      %755 = vmatprep.subr.mxu0 0.0
      %756 = vmatpush1.msra.mxu0 %v713
      %757 = vmatprep.subr.mxu0 0.0
      %758 = vmatpush2.msra.mxu0 0.0
      %759 = vmatprep.subr.mxu0 0.0
      %760 = vmatpush2.msra.mxu0 0.0
      %761 = vmatprep.subr.mxu0 0.0
      %762 = vmatpush2.msra.mxu0 0.0
      %763 = vmatprep.subr.mxu0 0.0
      %764 = vmatpush2.msra.mxu0 0.0
      %765 = vmatprep.subr.mxu0 0.0
      %766 = vmatpush2.msra.mxu0 0.0
      %767 = vmatprep.subr.mxu0 0.0
      %768 = vmatpush2.msra.mxu0 0.0
      %769 = vmatprep.subr.mxu0 0.0
      %770 = vmatpush2.msra.mxu0 0.0
      %771 = vmatprep.subr.mxu0 0.0
      %772 = vmatpush2.msra.mxu0 0.0
      %773 = vmatprep.subr.mxu0 0.0
      %774 = vmatpush2.msra.mxu0 0.0
      %775 = vmatprep.subr.mxu0 0.0
      %776 = vmatpush2.msra.mxu0 0.0
      %777 = vmatprep.subr.mxu0 0.0
      %778 = vmatpush2.msra.mxu0 0.0
      %779 = vmatprep.subr.mxu0 0.0
      %780 = vmatpush2.msra.mxu0 0.0
      %781 = vmatprep.subr.mxu0 0.0
      %782 = vmatpush2.msra.mxu0 0.0
      %783 = vmatprep.subr.mxu0 0.0
      %784 = vmatpush2.msra.mxu0 0.0
      %785 = vmatprep.subr.mxu0 0.0
      %786 = vmatpush2.msra.mxu0 0.0
      %787 = vmatprep.subr.mxu0 0.0
      %788 = vmatpush2.msra.mxu0 0.0
      %789 = vmatprep.mubr.f32.mxu0 0.0
      %790 = vmatmul.mubr.f32.gmra.mxu0 %v723
      %v791 = vpop.f32.mrf.mxu0
      %v792 = vadd.f32 0.0, %v791
      %v793 = vpop.f32.mrf.mxu0
      %794 = vdwg.mxu0
      %v795 = vmax.f32 %v792, 0.0
      %v797 = vrot.slane %v795, 4
      %v799 = vadd.f32 %v795, %v797
      %v800 = vld [vmem:[%s2] sm:$0xf]
      %vm801 = vcmask 31744
      %v803 = vsel %vm801, %v799, 0
      %v806 = vsel %vm711, %v800, 0
      %808 = vmatprep.subr.mxu0 0.0
      %809 = vmatpush1.msra.mxu0 0.0
      %810 = vmatprep.subr.mxu0 0.0
      %811 = vmatpush1.msra.mxu0 0.0
      %812 = vmatprep.subr.mxu0 0.0
      %813 = vmatpush1.msra.mxu0 0.0
      %814 = vmatprep.subr.mxu0 0.0
      %815 = vmatpush1.msra.mxu0 0.0
      %816 = vmatprep.subr.mxu0 0.0
      %817 = vmatpush1.msra.mxu0 0.0
      %818 = vmatprep.subr.mxu0 0.0
      %819 = vmatpush1.msra.mxu0 0.0
      %820 = vmatprep.subr.mxu0 0.0
      %821 = vmatpush1.msra.mxu0 0.0
      %822 = vmatprep.subr.mxu0 0.0
      %823 = vmatpush1.msra.mxu0 0.0
      %824 = vmatprep.subr.mxu0 0.0
      %825 = vmatpush1.msra.mxu0 0.0
      %826 = vmatprep.subr.mxu0 0.0
      %827 = vmatpush1.msra.mxu0 0.0
      %828 = vmatprep.subr.mxu0 0.0
      %829 = vmatpush1.msra.mxu0 0.0
      %830 = vmatprep.subr.mxu0 0.0
      %831 = vmatpush1.msra.mxu0 0.0
      %832 = vmatprep.subr.mxu0 0.0
      %833 = vmatpush1.msra.mxu0 0.0
      %834 = vmatprep.subr.mxu0 0.0
      %835 = vmatpush1.msra.mxu0 0.0
      %836 = vmatprep.subr.mxu0 0.0
      %837 = vmatpush1.msra.mxu0 0.0
      %838 = vmatprep.subr.mxu0 0.0
      %839 = vmatpush1.msra.mxu0 %v806
      %840 = vmatprep.subr.mxu0 0.0
      %841 = vmatpush2.msra.mxu0 0.0
      %842 = vmatprep.subr.mxu0 0.0
      %843 = vmatpush2.msra.mxu0 0.0
      %844 = vmatprep.subr.mxu0 0.0
      %845 = vmatpush2.msra.mxu0 0.0
      %846 = vmatprep.subr.mxu0 0.0
      %847 = vmatpush2.msra.mxu0 0.0
      %848 = vmatprep.subr.mxu0 0.0
      %849 = vmatpush2.msra.mxu0 0.0
      %850 = vmatprep.subr.mxu0 0.0
      %851 = vmatpush2.msra.mxu0 0.0
      %852 = vmatprep.subr.mxu0 0.0
      %853 = vmatpush2.msra.mxu0 0.0
      %854 = vmatprep.subr.mxu0 0.0
      %855 = vmatpush2.msra.mxu0 0.0
      %856 = vmatprep.subr.mxu0 0.0
      %857 = vmatpush2.msra.mxu0 0.0
      %858 = vmatprep.subr.mxu0 0.0
      %859 = vmatpush2.msra.mxu0 0.0
      %860 = vmatprep.subr.mxu0 0.0
      %861 = vmatpush2.msra.mxu0 0.0
      %862 = vmatprep.subr.mxu0 0.0
      %863 = vmatpush2.msra.mxu0 0.0
      %864 = vmatprep.subr.mxu0 0.0
      %865 = vmatpush2.msra.mxu0 0.0
      %866 = vmatprep.subr.mxu0 0.0
      %867 = vmatpush2.msra.mxu0 0.0
      %868 = vmatprep.subr.mxu0 0.0
      %869 = vmatpush2.msra.mxu0 0.0
      %870 = vmatprep.subr.mxu0 0.0
      %871 = vmatpush2.msra.mxu0 0.0
      %872 = vmatprep.mubr.f32.mxu0 0.0
      %873 = vmatmul.mubr.f32.gmra.mxu0 %v803
      %v874 = vpop.f32.mrf.mxu0
      %v875 = vadd.f32 0.0, %v874
      %v876 = vpop.f32.mrf.mxu0
      %877 = vdwg.mxu0
      %v878 = vxor.u32 %v875, 2147483648
      %v879 = vmul.f32 %v878, 1.442695
      %v880 = vpow.pop %v879
      %v881 = vadd.f32 %v880, 1.0
      %v882 = vrcp.pop %v881
      %v883 = vmul.f32 1.0, %v882
      %v886 = vunpack.c.l.s4 1966171168
      %v887 = vunpack.c.0.s8 %v886
      %v888 = vlaneseq
      %v889 = vshrl.u32 %v888, 7
      %v890 = vsub.s32 %v887, %v889
      %v891 = vrot.slane %v883, %v890
      %v892 = vcombine.high %v891, %v891
      %v894 = vunpack.c.l.s4 1966171168
      %v895 = vunpack.c.0.s8 %v894
      %v896 = vlaneseq
      %v897 = vshrl.u32 %v896, 7
      %v898 = vsub.s32 %v895, %v897
      %v899 = vrot.slane %v891, %v898
      %v901 = vunpack.c.l.s4 1966171168
      %v902 = vunpack.c.0.s8 %v901
      %v903 = vlaneseq
      %v904 = vshrl.u32 %v903, 7
      %v905 = vsub.s32 %v902, %v904
      %v906 = vrot.slane %v892, %v905
      %v907 = vcombine.high %v899, %v899
      %v908 = vcombine.high %v906, %v906
      %vm913 = vcmask 516096
      %914 = vst.msk [vmem:[#allocation7] sm:$0x1] %vm913, %v899
      %915 = vst.msk [vmem:[#allocation7 + $0x1] sm:$0x1] %vm913, %v906
      %916 = vst.msk [vmem:[#allocation7 + $0x2] sm:$0x1] %vm913, %v907
      %917 = vst.msk [vmem:[#allocation7 + $0x3] sm:$0x1] %vm913, %v908
    $region25: #{tpu_custom_call.1} parent=1 // pred_fallthru
      _
    // Predicated region
    $region26: #{tpu_custom_call.1} parent=1 // pred_check
      _
    $region27: #{tpu_custom_call.1} parent=1 // pred_check_branch
      %919 = sbr.rel (0) target = $region29
    $region28: #{tpu_custom_call.1} parent=1 // pred_region
      %s921 = ssub.s32 64, 64
      %922 = vsyncadd [#allocation6], %s921
      %s923 = sshll.u32 [#allocation7], 4
      %s924 = int_to_ptr.vmem [resolvable:$true] %s923
      %929 = dma.vmem_to_hbm [thread:$0]  %s924, 64, %s3, [#allocation6], 16, 16, 1
    $region29: #{tpu_custom_call.1} parent=1 // pred_fallthru
      _
    // Predicated region
    $region30: #{tpu_custom_call.1} parent=1 // pred_check
      _
    $region31: #{tpu_custom_call.1} parent=1 // pred_check_branch
      %931 = sbr.rel (0) target = $region33
    $region32: #{tpu_custom_call.1} parent=1 // pred_region
      %932 = dma.done [#allocation6], 64
    $region33: #{tpu_custom_call.1} parent=1 // pred_fallthru
      _
    %933 = vsyncpa [#allocation5], 1
    %934 = vsyncpa [#allocation6], 1

</llo_original>
